<compile_context>
chip_gen: v7x
topology: tpu7x:2x2x1
jax: 0.10.0
libtpu: 0.0.40
codegen_flags: <defaults>
</compile_context>

<pallas_src>
import functools

import jax
import jax.numpy as jnp
from jax import lax
from jax.experimental import pallas as pl
from jax.experimental.pallas import tpu as pltpu

NUM_EMB = 118 + 1          # 118 elements + padding index 0
TABLE_K_PAD = 128          # MXU-friendly contraction width


def _round_up(x, m):
    return ((x + m - 1) // m) * m


def _cdiv(a, b):
    return -(-a // b)


def _choose_tiling(n, *, max_tile, align, min_steps=2):
    """Pick (tile, n_pad): tile is a multiple of `align`, tile <= max_tile
    (rounded to align), n_pad = tile * n_steps >= n, and n_steps >= min_steps
    whenever the input is big enough (keeps both v7x TensorCores busy)."""
    n_align = _round_up(max(n, 1), align)
    n_steps = _cdiv(n_align, max_tile)
    if n_steps < min_steps and n_align >= min_steps * align:
        n_steps = min_steps
    tile = _round_up(_cdiv(n_align, n_steps), align)
    return tile, tile * n_steps


# ---------------------------------------------------------------------------
# Kernel 1: node embedding (gather via one-hot matmul on the MXU)
# ---------------------------------------------------------------------------
def _embedding_kernel(z_ref, table_ref, out_ref, *, onehot_dtype):
    z = z_ref[...]                                               # (tile_a, 1) int32
    ids = lax.broadcasted_iota(jnp.int32, (1, TABLE_K_PAD), 1)   # (1, 128)
    onehot = (z == ids).astype(onehot_dtype)                     # (tile_a, 128)
    # NOTE: z >= 119 gives an all-zero row (silent zero embedding); torch's
    # nn.Embedding would raise. Valid inputs (0..118) match torch exactly.
    out_ref[...] = jnp.dot(
        onehot, table_ref[...],
        preferred_element_type=jnp.float32,
    ).astype(out_ref.dtype)


def node_embedding(z, table, *, max_tile_a=1024):
    n_atoms = z.shape[0]
    n_features = table.shape[1]

    # Use the bf16 MXU path when the table is 16-bit (one-hot values are exact
    # in bf16); keep f32 operands for an f32 table (v5e: MXU still fine, VPU
    # math elsewhere stays f32).
    onehot_dtype = table.dtype if jnp.dtype(table.dtype).itemsize == 2 else jnp.float32
    table_p = jnp.pad(table, ((0, TABLE_K_PAD - NUM_EMB), (0, 0))).astype(onehot_dtype)

    tile_a, n_pad = _choose_tiling(n_atoms, max_tile=max_tile_a, align=8)
    # Padded rows use index 0 (the zeroed padding row) and are sliced away.
    z2 = jnp.pad(z.astype(jnp.int32), (0, n_pad - n_atoms))[:, None]

    kernel = functools.partial(_embedding_kernel, onehot_dtype=onehot_dtype)
    out = pl.pallas_call(
        kernel,
        out_shape=jax.ShapeDtypeStruct((n_pad, n_features), table.dtype),
        grid_spec=pltpu.PrefetchScalarGridSpec(
            num_scalar_prefetch=0,
            grid=(n_pad // tile_a,),
            in_specs=[
                pl.BlockSpec((tile_a, 1), lambda i: (i, 0)),
                pl.BlockSpec((TABLE_K_PAD, n_features), lambda i: (0, 0)),
            ],
            out_specs=pl.BlockSpec((tile_a, n_features), lambda i: (i, 0)),
        ),
        compiler_params=pltpu.CompilerParams(
            dimension_semantics=("parallel",)),
    )(z2, table_p)
    return out[:n_atoms]


# ---------------------------------------------------------------------------
# Kernel 2 (edge-major layout): dist = ||disp||, dir = disp/dist,
#           dist_edge = cosine_cutoff(dist) * bessel_rbf(dist)
# ---------------------------------------------------------------------------
def _edge_kernel(disp_ref, dir_ref, rbf_ref, *, cutoff, n_basis):
    disp = disp_ref[...].astype(jnp.float32)                     # (3, tile_e)
    d2 = jnp.sum(disp * disp, axis=0, keepdims=True)             # (1, tile_e)
    inv_d = lax.rsqrt(d2)                                        # EUP, once per edge
    dist = d2 * inv_d                                            # ||disp|| (VPU)

    # direction: lane-dense (3, tile_e) store
    # (edges with zero displacement give NaN, matching torch's disp/dist)
    dir_ref[...] = (disp * inv_d).astype(dir_ref.dtype)

    # cosine cutoff: 0.5 * (cos(pi*d/rc) + 1) for d < rc, else 0.
    # Compare on d^2 to avoid the d2*rsqrt(d2) ULP issue at the boundary.
    x = dist * (jnp.pi / cutoff)                                  # (1, tile_e)
    cut = jnp.where(d2 < cutoff * cutoff, 0.5 * (jnp.cos(x) + 1.0), 0.0)

    # Bessel radial basis: sqrt(2/rc) * sin(k*pi*d/rc) / d, k = 1..n_basis,
    # already multiplied by the cutoff -> one combined prefactor per edge.
    scale = (((2.0 / cutoff) ** 0.5) * cut) * inv_d               # (1, tile_e)

    # sin(k*x) for all k at once: full 8/8 sublane utilization on the EUP,
    # no serial dependency chain, and the result streams straight to the
    # lane-dense (n_basis, tile_e) output block.
    k = lax.broadcasted_iota(jnp.float32, (n_basis, 1), 0) + 1.0  # (n_basis, 1)
    rbf_ref[...] = (jnp.sin(k * x) * scale).astype(rbf_ref.dtype)


def edge_embedding(disp, *, cutoff, n_basis, max_tile_e=8192):
    """Returns edge-major (3, n_edges) direction and (n_basis, n_edges) rbf."""
    n_edges = disp.shape[0]
    dtype = disp.dtype

    tile_e, n_pad = _choose_tiling(n_edges, max_tile=max_tile_e, align=128)

    # Edge-major layout: edges on the 128-lane axis. Padded columns get a unit
    # displacement so the padded region stays finite; they are sliced away.
    disp_t = jnp.pad(disp.astype(jnp.float32).T,
                     ((0, 0), (0, n_pad - n_edges)), constant_values=1.0)

    kernel = functools.partial(_edge_kernel, cutoff=float(cutoff),
                               n_basis=n_basis)
    dir_t, rbf_t = pl.pallas_call(
        kernel,
        out_shape=(
            jax.ShapeDtypeStruct((3, n_pad), dtype),        # dir (edge-major)
            jax.ShapeDtypeStruct((n_basis, n_pad), dtype),  # rbf (edge-major)
        ),
        grid_spec=pltpu.PrefetchScalarGridSpec(
            num_scalar_prefetch=0,
            grid=(n_pad // tile_e,),
            in_specs=[pl.BlockSpec((3, tile_e), lambda i: (0, i))],
            out_specs=[
                pl.BlockSpec((3, tile_e), lambda i: (0, i)),
                pl.BlockSpec((n_basis, tile_e), lambda i: (0, i)),
            ],
        ),
        compiler_params=pltpu.CompilerParams(
            dimension_semantics=("parallel",)),
    )(disp_t)

    return dir_t[:, :n_edges], rbf_t[:, :n_edges]


# ---------------------------------------------------------------------------
# EmbeddingNet forward (wrapper glue in plain JAX)
# ---------------------------------------------------------------------------
def embedding_net_forward(z, disp, table, *, cutoff, n_basis, edge_major=False):
    n_atoms = z.shape[0]
    n_features = table.shape[1]

    atom_node = node_embedding(z, table)                          # [n_atoms, F]
    # Pure zero buffers required by the module's contract; XLA materializes
    # them as broadcast-zeros (consumers that only add to them can fuse this).
    force_node = jnp.zeros((n_atoms, 3, n_features), disp.dtype)
    disp_node = jnp.zeros((n_atoms, 3, n_features), disp.dtype)

    dir_e, rbf_e = edge_embedding(disp, cutoff=cutoff, n_basis=n_basis)
    if edge_major:
        # Edge-major layout the kernel was designed around; preferred for
        # downstream Pallas consumers (avoids two HBM-roundtrip transposes).
        return atom_node, force_node, disp_node, dir_e, rbf_e

    # torch layout: [n_edges, 3] / [n_edges, n_basis]
    return atom_node, force_node, disp_node, dir_e.T, rbf_e.T


# ---------------------------------------------------------------------------
# Pure-JAX reference (torch semantics) for a correctness check
# ---------------------------------------------------------------------------
def _reference(z, disp, table, cutoff, n_basis):
    atom_node = table[z]
    dist = jnp.sqrt(jnp.sum(disp * disp, axis=-1, keepdims=True))
    dir_edge = disp / dist
    cut = jnp.where(dist < cutoff,
                    0.5 * (jnp.cos(jnp.pi * dist / cutoff) + 1.0), 0.0)
    n = jnp.arange(1, n_basis + 1, dtype=jnp.float32)[None, :]
    rbf = jnp.sqrt(2.0 / cutoff) * jnp.sin(dist * n * jnp.pi / cutoff) / dist
    return atom_node, dir_edge, cut * rbf


if __name__ == "__main__":
    n_features = 32
    n_basis = 16
    cutoff = 5.0
    n_atoms = 16
    n_edges = 32

    key = jax.random.PRNGKey(0)
    k_tab, k_z, k_disp = jax.random.split(key, 3)

    # nn.Embedding(119, n_features, padding_idx=0): row 0 is zeroed.
    table = jax.random.normal(k_tab, (NUM_EMB, n_features), dtype=jnp.float32)
    table = table.at[0].set(0.0)

    # atomic numbers in 1..118 with one padding entry
    z = jax.random.randint(k_z, (n_atoms,), 1, 119, dtype=jnp.int32)
    z = z.at[-1].set(0)

    # edge displacement vectors
    disp = 2.0 * jax.random.normal(k_disp, (n_edges, 3), dtype=jnp.float32)

    outs = embedding_net_forward(z, disp, table, cutoff=cutoff, n_basis=n_basis)
    outs = jax.block_until_ready(outs)
    atom_node, force_node, disp_node, dir_edge, dist_edge = outs

    assert atom_node.shape == (n_atoms, n_features)
    assert force_node.shape == (n_atoms, 3, n_features)
    assert disp_node.shape == (n_atoms, 3, n_features)
    assert dir_edge.shape == (n_edges, 3)
    assert dist_edge.shape == (n_edges, n_basis)

    ref_atom, ref_dir, ref_rbf = _reference(z, disp, table, cutoff, n_basis)
    assert bool(jnp.allclose(atom_node, ref_atom, atol=1e-5, rtol=1e-5))
    assert bool(jnp.allclose(dir_edge, ref_dir, atol=1e-4, rtol=1e-4))
    assert bool(jnp.allclose(dist_edge, ref_rbf, atol=1e-4, rtol=1e-4))
    assert bool(jnp.all(force_node == 0)) and bool(jnp.all(disp_node == 0))

    print("KERNEL_OK")
</pallas_src>

<mosaic_0001>
module attributes {stable_mosaic.version = 11 : i64} {
  func.func @_embedding_kernel(%arg0: i32, %arg1: memref<8x1xi32, #tpu.memory_space<vmem>>, %arg2: memref<128x32xf32, #tpu.memory_space<vmem>>, %arg3: memref<8x32xf32, #tpu.memory_space<vmem>>) attributes {dimension_semantics = [#tpu.dimension_semantics<parallel>], iteration_bounds = array<i64: 2>, scalar_prefetch = 0 : i64, scratch_operands = 0 : i64, tpu.core_type = #tpu.core_type<tc>, window_params = [{transform_indices = @transform_0, window_bounds = array<i64: 8, 1>}, {pipeline_mode = #tpu.pipeline_mode<synchronous>, transform_indices = @transform_1, window_bounds = array<i64: 128, 32>}, {transform_indices = @transform_2, window_bounds = array<i64: 8, 32>}]} {
    %c0 = arith.constant 0 : index
    %c0_0 = arith.constant 0 : index
    %0 = vector.load %arg1[%c0, %c0_0] : memref<8x1xi32, #tpu.memory_space<vmem>>, vector<8x1xi32>
    %1 = tpu.iota {dimensions = array<i32: 1>} : vector<1x128xi32>
    %2 = vector.broadcast %0 : vector<8x1xi32> to vector<8x128xi32>
    %3 = vector.broadcast %1 : vector<1x128xi32> to vector<8x128xi32>
    %4 = arith.cmpi eq, %2, %3 : vector<8x128xi32>
    %5 = arith.extui %4 : vector<8x128xi1> to vector<8x128xi32>
    %6 = arith.sitofp %5 : vector<8x128xi32> to vector<8x128xf32>
    %c0_1 = arith.constant 0 : index
    %c0_2 = arith.constant 0 : index
    %7 = vector.load %arg2[%c0_1, %c0_2] : memref<128x32xf32, #tpu.memory_space<vmem>>, vector<128x32xf32>
    %cst = arith.constant dense<0.000000e+00> : vector<8x32xf32>
    %8 = tpu.matmul %6, %7, %cst {dimension_numbers = #tpu.dot_dimension_numbers<[1], [0], [0], [1], [0, 0, 1, 1], [], []>} : vector<8x128xf32>, vector<128x32xf32>, vector<8x32xf32> -> vector<8x32xf32>
    %c0_3 = arith.constant 0 : index
    %c0_4 = arith.constant 0 : index
    %9 = vector.load %arg3[%c0_3, %c0_4] : memref<8x32xf32, #tpu.memory_space<vmem>>, vector<8x32xf32>
    tpu.vector_store %arg3[%c0_3, %c0_4], %8 {strides = array<i32>} : memref<8x32xf32, #tpu.memory_space<vmem>>, vector<8x32xf32>,
    return
  }
  func.func @transform_0(%arg0: i32) -> (i32, i32) {
    %c0_i32 = arith.constant 0 : i32
    %c0_i32_0 = arith.constant 0 : i32
    return %arg0, %c0_i32 : i32, i32
  }
  func.func @transform_1(%arg0: i32) -> (i32, i32) {
    %c0_i32 = arith.constant 0 : i32
    %c0_i32_0 = arith.constant 0 : i32
    %c0_i32_1 = arith.constant 0 : i32
    return %c0_i32, %c0_i32_0 : i32, i32
  }
  func.func @transform_2(%arg0: i32) -> (i32, i32) {
    %c0_i32 = arith.constant 0 : i32
    %c0_i32_0 = arith.constant 0 : i32
    return %arg0, %c0_i32 : i32, i32
  }
}

</mosaic_0001>

<llo_original>
// kernel: tpu_custom_call.1
$region0: #{tpu_custom_call.1}
  #allocation0 [shape = 'u32[]', space=smem, size = 0x4, offset = 0x4, fixed_abs, tag = 'smem constant byte address 0x4 - core index']
  #allocation1 [shape = 'u32[144,128]{1,0:T(1,128)}', space=vmem, size = 0x12000, scoped, tag = 'internal scratch']
  %s0 = inlined_call_operand.vmem [shape: s32[16,1], index: 0, kind: input, shape index: {}]
  %s1 = inlined_call_operand.vmem [shape: f32[128,32], index: 1, kind: input, shape index: {}]
  %s2 = inlined_call_operand.hbm [shape: f32[16,32], index: 2, kind: output, shape index: {}]
  %s3 = sld [smem:[#allocation0]]
  $region41: #{tpu_custom_call.1} parent=0
    _
  %s5 = ssub.s32 1, %s3
  %s6 = scalar_select 0, %s5, %s3
  $region1: #{tpu_custom_call.1} parent=0
    #allocation2 [shape = 'u8[8192]{0}', space=vmem, size = 0x2000, scoped, tag = 'output window, operand 0']
    #allocation3 [shape = 's32[2]{0}', space=sflag, size = 0x8, scoped, tag = 'scoped memory for tpu_custom_call.1']
    %7 = vsyncpa [#allocation3], 0
    %s8 = scalar_lea.sflag [#allocation3], 1
    %9 = vsyncpa %s8, 0
    loop: start=0, step=1, limit=4
    $region2: #{tpu_custom_call.1} parent=1 // loop_pre_header
      _
    $region3: #{tpu_custom_call.1} parent=1 // loop_header
      %s11 = sphi 0, %s15
      %p12 = scmp.ge.s32.totalorder %s11, 4
      %s21 = sphi 0, %s23
      %s24 = sphi 0, %s21
      %s25 = sphi 0, %s24
      %s41 = sphi 0, %s25
      %s45 = sphi 0, %s45
      %s47 = sphi 0, %s45
      %s48 = sphi 0, %s47
      %s62 = sphi 0, %s48
      %s68 = sphi 0, %s70
      %s71 = sphi 0, %s68
      %s72 = sphi 0, %s71
      %s88 = sphi 0, %s72
    $region4: #{tpu_custom_call.1} parent=1 // loop_header_branch
      %14 = sbr.rel (%p12) target = $region8
    $region5: #{tpu_custom_call.1} parent=1 // loop_body
      %s16 = ssub.s32 %s11, 1
      %s17 = ssub.s32 %s11, 2
      %s18 = sadd.s32 %s11, 1
      %s19 = ssub.s32 %s11, %s18
      %p20 = scmp.eq.s32.totalorder %s19, 0
      %s22 = sadd.s32 %s21, 1
      %s23 = scalar_select %p20, %s21, %s22
      %p26 = pneg %p20
      %p27 = scmp.eq.s32.totalorder %s11, 1
      %p28 = por %p26, %p27
      %p29 = scmp.ne.s32.totalorder %s21, %s24
      %p30 = scmp.eq.s32.totalorder %s11, 0
      %p31 = por %p29, %p30
      %p32 = scmp.ne.s32.totalorder %s21, %s24
      %p33 = scmp.eq.s32.totalorder %s16, 1
      %p34 = por %p32, %p33
      %p35 = scmp.ne.s32.totalorder %s24, %s25
      %p36 = scmp.eq.s32.totalorder %s16, 0
      %p37 = por %p35, %p36
      %p38 = scmp.ne.s32.totalorder %s24, %s25
      %p39 = scmp.eq.s32.totalorder %s17, 1
      %p40 = por %p38, %p39
      %p42 = scmp.ne.s32.totalorder %s25, %s41
      %p43 = scmp.eq.s32.totalorder %s17, 0
      %p44 = por %p42, %p43
      %s46 = sadd.s32 %s45, 1
      %p49 = scmp.eq.s32.totalorder %s11, 1
      %p50 = scmp.ne.s32.totalorder %s45, %s47
      %p51 = scmp.eq.s32.totalorder %s11, 0
      %p52 = por %p50, %p51
      %p53 = scmp.ne.s32.totalorder %s45, %s47
      %p54 = scmp.eq.s32.totalorder %s16, 1
      %p55 = por %p53, %p54
      %p56 = scmp.ne.s32.totalorder %s47, %s48
      %p57 = scmp.eq.s32.totalorder %s16, 0
      %p58 = por %p56, %p57
      %p59 = scmp.ne.s32.totalorder %s47, %s48
      %p60 = scmp.eq.s32.totalorder %s17, 1
      %p61 = por %p59, %p60
      %p63 = scmp.ne.s32.totalorder %s48, %s62
      %p64 = scmp.eq.s32.totalorder %s17, 0
      %p65 = por %p63, %p64
      %s66 = ssub.s32 %s11, %s18
      %p67 = scmp.eq.s32.totalorder %s66, 0
      %s69 = sadd.s32 %s68, 1
      %s70 = scalar_select %p67, %s68, %s69
      %p73 = pneg %p67
      %p74 = scmp.eq.s32.totalorder %s11, 1
      %p75 = por %p73, %p74
      %p76 = scmp.ne.s32.totalorder %s68, %s71
      %p77 = scmp.eq.s32.totalorder %s11, 0
      %p78 = por %p76, %p77
      %p79 = scmp.ne.s32.totalorder %s68, %s71
      %p80 = scmp.eq.s32.totalorder %s16, 1
      %p81 = por %p79, %p80
      %p82 = scmp.ne.s32.totalorder %s71, %s72
      %p83 = scmp.eq.s32.totalorder %s16, 0
      %p84 = por %p82, %p83
      %p85 = scmp.ne.s32.totalorder %s71, %s72
      %p86 = scmp.eq.s32.totalorder %s17, 1
      %p87 = por %p85, %p86
      %p89 = scmp.ne.s32.totalorder %s72, %s88
      %p90 = scmp.eq.s32.totalorder %s17, 0
      %p91 = por %p89, %p90
      %p92 = scmp.le.s32.totalorder 1, %s11
      %p93 = scmp.lt.s32.totalorder %s11, 3
      %p94 = pnand %p92, %p93
      %p95 = pneg %p94
      // Predicated region
      $region9: #{tpu_custom_call.1} parent=5 // pred_check
        _
      $region10: #{tpu_custom_call.1} parent=5 // pred_check_branch
        %97 = sbr.rel (%p94) target = $region12
      $region11: #{tpu_custom_call.1} parent=5 // pred_region
        %s98 = ssub.s32 %s11, 1
        // Predicated region
        $region13: #{tpu_custom_call.1} parent=11 // pred_check
          %p99 = pneg %p58
        $region14: #{tpu_custom_call.1} parent=11 // pred_check_branch
          %101 = sbr.rel (%p99) target = $region16
        $region15: #{tpu_custom_call.1} parent=11 // pred_region
          _
        $region16: #{tpu_custom_call.1} parent=11 // pred_fallthru
          _
      $region12: #{tpu_custom_call.1} parent=5 // pred_fallthru
        _
      %p102 = scmp.lt.s32.totalorder %s11, 2
      // Predicated region
      $region17: #{tpu_custom_call.1} parent=5 // pred_check
        %p103 = pneg %p102
      $region18: #{tpu_custom_call.1} parent=5 // pred_check_branch
        %105 = sbr.rel (%p103) target = $region20
      $region19: #{tpu_custom_call.1} parent=5 // pred_region
        // Predicated region
        $region21: #{tpu_custom_call.1} parent=19 // pred_check
          %p106 = pneg %p31
        $region22: #{tpu_custom_call.1} parent=19 // pred_check_branch
          %108 = sbr.rel (%p106) target = $region24
        $region23: #{tpu_custom_call.1} parent=19 // pred_region
          %p109 = scmp.lt.s32.totalorder %s11, 1
          %s110 = scalar_select %p109, %s11, 1
          %s111 = smul.addr %s110, 8
          %s112 = scalar_lea.vmem %s0, %s111
        $region24: #{tpu_custom_call.1} parent=19 // pred_fallthru
          _
      $region20: #{tpu_custom_call.1} parent=5 // pred_fallthru
        _
      %p113 = scmp.le.s32.totalorder 1, %s11
      %p114 = scmp.lt.s32.totalorder %s11, 3
      %p115 = pnand %p113, %p114
      %p116 = pneg %p115
      // Predicated region
      $region25: #{tpu_custom_call.1} parent=5 // pred_check
        _
      $region26: #{tpu_custom_call.1} parent=5 // pred_check_branch
        %118 = sbr.rel (%p115) target = $region28
      $region27: #{tpu_custom_call.1} parent=5 // pred_region
        %s119 = ssub.s32 %s11, 1
        %p120 = scmp.lt.s32.totalorder %s16, 1
        %s121 = scalar_select %p120, %s16, 1
        %s122 = smul.addr %s121, 8
        %s123 = scalar_lea.vmem %s0, %s122
        %p124 = pneg %p37
        %p125 = pneg %p34
        %p126 = pneg %p58
        %p127 = pneg %p55
        %p128 = pneg %p84
        %p129 = pneg %p81
        %s130 = sand.u32 %s71, 1
        %s131 = scalar_lea.sflag [#allocation3], %s130
        %s132 = sand.u32 %s71, 1
        %s133 = smul.addr %s132, 8
        %s134 = scalar_lea.vmem [#allocation2], %s133
        %p135 = scmp.lt.s32.totalorder %s16, 1
        %s136 = scalar_select %p135, %s16, 1
        %s137 = smul.addr %s136, 8
        %s138 = scalar_lea.vmem %s0, %s137
        %v139 = vld [vmem:[%s138] sm:$0xff]
        %v140 = vlaneseq
        %v141 = vand.u32 %v140, 127
        %142 = vset.pattern.permute.xlu0 0
        %143 = vperm.xlu0 %142, %v139
        %v144 = vpop.permute.xlu0 %143
        %vm145 = vcmp.eq.s32.totalorder %v144, %v141
        %v146 = vsel %vm145, 1, 0
        %v147 = vcvt.s32.f32 %v146
        %v148 = vld [vmem:[%s1] sm:$0xff]
        %v149 = vld [vmem:[%s1 + $0x8] sm:$0xff]
        %v150 = vld [vmem:[%s1 + $0x10] sm:$0xff]
        %v151 = vld [vmem:[%s1 + $0x18] sm:$0xff]
        %v152 = vld [vmem:[%s1 + $0x20] sm:$0xff]
        %v153 = vld [vmem:[%s1 + $0x28] sm:$0xff]
        %v154 = vld [vmem:[%s1 + $0x30] sm:$0xff]
        %v155 = vld [vmem:[%s1 + $0x38] sm:$0xff]
        %v156 = vld [vmem:[%s1 + $0x40] sm:$0xff]
        %v157 = vld [vmem:[%s1 + $0x48] sm:$0xff]
        %v158 = vld [vmem:[%s1 + $0x50] sm:$0xff]
        %v159 = vld [vmem:[%s1 + $0x58] sm:$0xff]
        %v160 = vld [vmem:[%s1 + $0x60] sm:$0xff]
        %v161 = vld [vmem:[%s1 + $0x68] sm:$0xff]
        %v162 = vld [vmem:[%s1 + $0x70] sm:$0xff]
        %v163 = vld [vmem:[%s1 + $0x78] sm:$0xff]
        %164 = vmatprep.subr.mxu0 0.0
        %165 = vmatpush1.msra.mxu0 %v148
        %166 = vmatprep.subr.mxu0 0.0
        %167 = vmatpush1.msra.mxu0 %v149
        %168 = vmatprep.subr.mxu0 0.0
        %169 = vmatpush1.msra.mxu0 %v150
        %170 = vmatprep.subr.mxu0 0.0
        %171 = vmatpush1.msra.mxu0 %v151
        %172 = vmatprep.subr.mxu0 0.0
        %173 = vmatpush1.msra.mxu0 %v152
        %174 = vmatprep.subr.mxu0 0.0
        %175 = vmatpush1.msra.mxu0 %v153
        %176 = vmatprep.subr.mxu0 0.0
        %177 = vmatpush1.msra.mxu0 %v154
        %178 = vmatprep.subr.mxu0 0.0
        %179 = vmatpush1.msra.mxu0 %v155
        %180 = vmatprep.subr.mxu0 0.0
        %181 = vmatpush1.msra.mxu0 %v156
        %182 = vmatprep.subr.mxu0 0.0
        %183 = vmatpush1.msra.mxu0 %v157
        %184 = vmatprep.subr.mxu0 0.0
        %185 = vmatpush1.msra.mxu0 %v158
        %186 = vmatprep.subr.mxu0 0.0
        %187 = vmatpush1.msra.mxu0 %v159
        %188 = vmatprep.subr.mxu0 0.0
        %189 = vmatpush1.msra.mxu0 %v160
        %190 = vmatprep.subr.mxu0 0.0
        %191 = vmatpush1.msra.mxu0 %v161
        %192 = vmatprep.subr.mxu0 0.0
        %193 = vmatpush1.msra.mxu0 %v162
        %194 = vmatprep.subr.mxu0 0.0
        %195 = vmatpush1.msra.mxu0 %v163
        %196 = vmatprep.subr.mxu0 0.0
        %197 = vmatpush1.msra.mxu0 0.0
        %198 = vmatprep.subr.mxu0 0.0
        %199 = vmatpush1.msra.mxu0 0.0
        %200 = vmatprep.subr.mxu0 0.0
        %201 = vmatpush1.msra.mxu0 0.0
        %202 = vmatprep.subr.mxu0 0.0
        %203 = vmatpush1.msra.mxu0 0.0
        %204 = vmatprep.subr.mxu0 0.0
        %205 = vmatpush1.msra.mxu0 0.0
        %206 = vmatprep.subr.mxu0 0.0
        %207 = vmatpush1.msra.mxu0 0.0
        %208 = vmatprep.subr.mxu0 0.0
        %209 = vmatpush1.msra.mxu0 0.0
        %210 = vmatprep.subr.mxu0 0.0
        %211 = vmatpush1.msra.mxu0 0.0
        %212 = vmatprep.subr.mxu0 0.0
        %213 = vmatpush1.msra.mxu0 0.0
        %214 = vmatprep.subr.mxu0 0.0
        %215 = vmatpush1.msra.mxu0 0.0
        %216 = vmatprep.subr.mxu0 0.0
        %217 = vmatpush1.msra.mxu0 0.0
        %218 = vmatprep.subr.mxu0 0.0
        %219 = vmatpush1.msra.mxu0 0.0
        %220 = vmatprep.subr.mxu0 0.0
        %221 = vmatpush1.msra.mxu0 0.0
        %222 = vmatprep.subr.mxu0 0.0
        %223 = vmatpush1.msra.mxu0 0.0
        %224 = vmatprep.subr.mxu0 0.0
        %225 = vmatpush1.msra.mxu0 0.0
        %226 = vmatprep.subr.mxu0 0.0
        %227 = vmatpush1.msra.mxu0 0.0
        %228 = vmatprep.mubr.f32.mxu0 0.0
        %229 = vmatmul.mubr.f32.gmra.mrb[0].mxu0 %v147
        %v230 = vpop.f32.mrb[0].mxu0
        %v231 = vadd.f32 0.0, %v230
        %v232 = vpop.f32.mrb[0].mxu0
        %233 = vdwg.mxu0
        %vm234 = vcmask 261120
        %235 = vst.msk [vmem:[%s134] sm:$0xff] %vm234, %v231
        %s236 = sand.u32 %s71, 1
        %s237 = scalar_lea.sflag [#allocation3], %s236
        %s238 = sand.u32 %s71, 1
        %s239 = smul.addr %s238, 8
        %s240 = scalar_lea.vmem [#allocation2], %s239
        // Predicated region
        $region29: #{tpu_custom_call.1} parent=27 // pred_check
          %p241 = pneg %p81
        $region30: #{tpu_custom_call.1} parent=27 // pred_check_branch
          %243 = sbr.rel (%p241) target = $region32
        $region31: #{tpu_custom_call.1} parent=27 // pred_region
          %s245 = ssub.s32 128, 128
          %246 = vsyncadd %s237, %s245
          %s247 = smul.addr %s16, 128
          %s248 = scalar_lea.hbm %s2, %s247
          %s250 = sshll.u32 %s240, 4
          %s251 = int_to_ptr.vmem [resolvable:$true] %s250
          %253 = dma.vmem_to_hbm [thread:$0]  %s251, 128, %s248, %s237
        $region32: #{tpu_custom_call.1} parent=27 // pred_fallthru
          _
      $region28: #{tpu_custom_call.1} parent=5 // pred_fallthru
        _
      %p254 = scmp.le.s32.totalorder 2, %s11
      // Predicated region
      $region33: #{tpu_custom_call.1} parent=5 // pred_check
        %p255 = pneg %p254
      $region34: #{tpu_custom_call.1} parent=5 // pred_check_branch
        %257 = sbr.rel (%p255) target = $region36
      $region35: #{tpu_custom_call.1} parent=5 // pred_region
        %s258 = ssub.s32 %s11, 2
        // Predicated region
        $region37: #{tpu_custom_call.1} parent=35 // pred_check
          %p259 = pneg %p87
        $region38: #{tpu_custom_call.1} parent=35 // pred_check_branch
          %261 = sbr.rel (%p259) target = $region40
        $region39: #{tpu_custom_call.1} parent=35 // pred_region
          %s262 = sand.u32 %s72, 1
          %s263 = scalar_lea.sflag [#allocation3], %s262
          %s264 = sand.u32 %s72, 1
          %s265 = smul.addr %s264, 8
          %s266 = scalar_lea.vmem [#allocation2], %s265
          %267 = dma.done %s263, 128
        $region40: #{tpu_custom_call.1} parent=35 // pred_fallthru
          _
      $region36: #{tpu_custom_call.1} parent=5 // pred_fallthru
        _
    $region6: #{tpu_custom_call.1} parent=1 // loop_footer
      %s15 = sadd.s32 1, %s11
    $region7: #{tpu_custom_call.1} parent=1 // loop_footer_branch
      %10 = sbr.rel target = $region3
    $region8: #{tpu_custom_call.1} parent=1 // loop_exit
      _
    %268 = vsyncpa [#allocation3], 1
    %s269 = scalar_lea.sflag [#allocation3], 1
    %270 = vsyncpa %s269, 1

</llo_original>
